<compile_context>
chip_gen: v7x
topology: tpu7x:2x2x1
jax: 0.10.0
libtpu: 0.0.40
codegen_flags: <defaults>
</compile_context>

<pallas_src>
import functools

import jax
import jax.numpy as jnp
from jax.experimental import pallas as pl
from jax.experimental.pallas import tpu as pltpu

_LANE = 128                 # lane width (last dim)
_SUBLANE_BF16 = 16          # bf16 packs 16 rows per (16, 128) tile
_TILE_CANDIDATES = (512, 256, 128, 64, 32, 16)
_TILE_STEP_OVERHEAD_ROWS = 8   # ~0.35us/step expressed as row-equivalents

_VMEM = pltpu.MemorySpace.VMEM


def _round_up(n, m):
    return ((n + m - 1) // m) * m


# ---------------------------------------------------------------------------
# Hardware introspection (conservative fallbacks; never fails)
# ---------------------------------------------------------------------------
@functools.lru_cache(maxsize=None)
def _tpu_generation_info():
    """Returns (num_tensorcores_per_chip, vmem_capacity_bytes)."""
    num_tc, vmem_cap = 1, 64 * 1024 * 1024        # conservative defaults
    try:
        kind = jax.devices()[0].device_kind.lower()
    except Exception:
        kind = ""
    if any(t in kind for t in ("v7", "7x", "tpu7")):
        num_tc, vmem_cap = 2, 64 * 1024 * 1024     # 2 TCs, 64 MiB / TC
    elif any(t in kind for t in ("v4", "v5p")):
        num_tc, vmem_cap = 2, 128 * 1024 * 1024    # megacore
    elif any(t in kind for t in ("v5", "v6")):
        num_tc, vmem_cap = 1, 128 * 1024 * 1024
    try:
        vmem_cap = int(pltpu.get_tpu_info().vmem_capacity_bytes)
    except Exception:
        pass
    return num_tc, vmem_cap


# ---------------------------------------------------------------------------
# In-kernel helpers
# ---------------------------------------------------------------------------
def _dense(x, w_bf16, b_f32):
    """y = x @ W + b, bf16 MXU operands, f32 accumulation + f32 elementwise."""
    return jnp.dot(x.astype(jnp.bfloat16), w_bf16,
                   preferred_element_type=jnp.float32) + b_f32


def _rmlp_body(x, w_in, b_in, w_mlp_ref, b_mlp_ref, depth):
    """forward(x) = in_block(x) + mlp_block(in_block(x)); Dropout == id."""
    h1 = jnp.maximum(_dense(x, w_in, b_in), 0.0)
    h = h1
    for i in range(depth):   # static unroll; depth is small
        h = jnp.maximum(_dense(h, w_mlp_ref[i], b_mlp_ref[i]), 0.0)
    return h1 + h


# ---------------------------------------------------------------------------
# Kernels
# ---------------------------------------------------------------------------
def _rmlp_kernel(x_ref, w_in_ref, b_in_ref, w_mlp_ref, b_mlp_ref, o_ref, *,
                 depth):
    o_ref[...] = _rmlp_body(x_ref[...], w_in_ref[...], b_in_ref[...],
                            w_mlp_ref, b_mlp_ref, depth)


def _siamese_fused_kernel(x_ref, xr_ref, w_in_ref, b_in_ref, w_mlp_ref,
                          b_mlp_ref, w_s1_ref, b_s1_ref, w_s2_ref, b_s2_ref,
                          o_ref, xx_ref, *, depth):
    """Fully fused siamese_forward: RMLP(x)/RMLP(x_ref) -> diff -> head."""
    tb = x_ref.shape[0]
    # Row-stack the two branches into a single VMEM scratch (two slice stores,
    # no jnp.concatenate copy) so the RMLP chain runs once on a (2*tb, F) tile.
    xx_ref[0:tb, :] = x_ref[...]
    xx_ref[tb:, :] = xr_ref[...]
    z = _rmlp_body(xx_ref[...], w_in_ref[...], b_in_ref[...], w_mlp_ref,
                   b_mlp_ref, depth)
    # NOTE: padded batch rows carry nonzero z (ReLU of biases); they are only
    # sliced away in the wrapper -- do not reduce over the batch axis here.
    diff = z[0:tb, :] - z[tb:, :]                # never touches HBM
    h = jnp.maximum(_dense(diff, w_s1_ref[...], b_s1_ref[...]), 0.0)
    o_ref[...] = _dense(h, w_s2_ref[...], b_s2_ref[...])


# ---------------------------------------------------------------------------
# Parameter packing: pad to lane-dense shapes, pre-cast weights to bf16
# ---------------------------------------------------------------------------
def _pad2(a, rows, cols):
    return jnp.pad(a, ((0, rows - a.shape[0]), (0, cols - a.shape[1])))


def pack_params(params):
    in_f, width = params["w_in"].shape
    depth = params["w_mlp"].shape[0]
    out_f = params["w_s2"].shape[1]

    fp = _round_up(in_f, _LANE)
    wp = _round_up(width, _LANE)
    op = _round_up(out_f, _LANE)

    packed = {
        "w_in": _pad2(params["w_in"], fp, wp).astype(jnp.bfloat16),
        "b_in": _pad2(params["b_in"], 1, wp),
        "w_mlp": jnp.pad(params["w_mlp"],
                         ((0, 0), (0, wp - width), (0, wp - width))
                         ).astype(jnp.bfloat16),
        "b_mlp": jnp.pad(params["b_mlp"], ((0, 0), (0, 0), (0, wp - width))),
        "w_s1": _pad2(params["w_s1"], wp, wp).astype(jnp.bfloat16),
        "b_s1": _pad2(params["b_s1"], 1, wp),
        "w_s2": _pad2(params["w_s2"], wp, op).astype(jnp.bfloat16),
        "b_s2": _pad2(params["b_s2"], 1, op),
    }
    dims = dict(in_features=in_f, width=width, out_features=out_f, depth=depth,
                fp=fp, wp=wp, op=op)
    return packed, dims


# ---------------------------------------------------------------------------
# Tiling / VMEM budgeting
# ---------------------------------------------------------------------------
def _choose_batch_tile(batch, num_tc):
    """Pick (padded_batch, tile) minimizing padded rows + per-step overhead.

    On 2-TensorCore chips force >= 2 grid steps so 'parallel' dimension
    semantics actually shards work across both cores."""
    bp = _round_up(max(batch, 1), _SUBLANE_BF16)
    best = None
    for tb in _TILE_CANDIDATES:
        padded = _round_up(bp, tb)
        tiles = padded // tb
        if num_tc >= 2 and bp > _SUBLANE_BF16 and tiles < 2:
            continue
        score = padded + _TILE_STEP_OVERHEAD_ROWS * tiles
        key = (score, -tb)
        if best is None or key < best[0]:
            best = (key, tb, padded)
    _, tb, padded = best
    return padded, tb


def _weight_bytes(dims, with_head):
    fp, wp, op, depth = dims["fp"], dims["wp"], dims["op"], dims["depth"]
    w = (fp * wp + depth * wp * wp) * 2 + (depth + 1) * wp * 4
    if with_head:
        w += (wp * wp + wp * op) * 2 + (wp + op) * 4
    return w


def _vmem_budget_bytes(dims, tb, *, n_act_inputs, with_head, vmem_cap):
    fp, wp, op = dims["fp"], dims["wp"], dims["op"]
    weights = _weight_bytes(dims, with_head)         # single-buffered (Buffered(1))
    acts = n_act_inputs * 2 * tb * fp * 2            # double-buffered bf16 inputs
    rows = (2 if with_head else 1) * tb
    outs = 2 * tb * (op if with_head else wp) * 4    # double-buffered f32 output
    scratch = rows * fp * 2 if with_head else 0      # xx stacking scratch
    live = 6 * rows * wp * 4                         # z / h1 / h / bf16 copies headroom
    need = weights + acts + outs + scratch + live + (8 << 20)
    return int(min(max(need, 32 << 20), int(vmem_cap * 0.9)))


def _compiler_params(vmem_limit):
    return pltpu.CompilerParams(
        dimension_semantics=("parallel",),           # batch tiles -> megacore
        vmem_limit_bytes=vmem_limit)


def _const_spec(shape):
    """Grid-invariant VMEM-resident operand: constant index_map + single buffer."""
    ndim = len(shape)
    return pl.BlockSpec(shape, lambda i, _n=ndim: (0,) * _n,
                        memory_space=_VMEM,
                        pipeline_mode=pl.Buffered(1))


def _weight_specs(dims):
    depth, fp, wp = dims["depth"], dims["fp"], dims["wp"]
    return [
        _const_spec((fp, wp)),
        _const_spec((1, wp)),
        _const_spec((depth, wp, wp)),
        _const_spec((depth, 1, wp)),
    ]


# ---------------------------------------------------------------------------
# Wrappers
# ---------------------------------------------------------------------------
def rmlp_forward(x, packed, dims):
    """Equivalent of DifferenceSiameseRMLP.forward (eval mode)."""
    batch = x.shape[0]
    num_tc, vmem_cap = _tpu_generation_info()
    bp, tb = _choose_batch_tile(batch, num_tc)
    fp, wp, depth = dims["fp"], dims["wp"], dims["depth"]
    x_pad = _pad2(x, bp, fp).astype(jnp.bfloat16)

    flops = 2 * bp * (fp * wp + depth * wp * wp)
    bytes_acc = bp * fp * 2 + _weight_bytes(dims, with_head=False) + bp * wp * 4
    vmem_limit = _vmem_budget_bytes(dims, tb, n_act_inputs=1, with_head=False,
                                    vmem_cap=vmem_cap)

    out = pl.pallas_call(
        functools.partial(_rmlp_kernel, depth=depth),
        out_shape=jax.ShapeDtypeStruct((bp, wp), jnp.float32),
        grid=(bp // tb,),
        in_specs=[pl.BlockSpec((tb, fp), lambda i: (i, 0), memory_space=_VMEM)]
        + _weight_specs(dims),
        out_specs=pl.BlockSpec((tb, wp), lambda i: (i, 0), memory_space=_VMEM),
        compiler_params=_compiler_params(vmem_limit),
        cost_estimate=pl.CostEstimate(flops=int(flops), transcendentals=0,
                                      bytes_accessed=int(bytes_acc)),
    )(x_pad, packed["w_in"], packed["b_in"], packed["w_mlp"], packed["b_mlp"])
    return out[:batch, :dims["width"]]


def siamese_forward(x, x_ref, packed, dims):
    """Equivalent of DifferenceSiameseRMLP.siamese_forward (eval mode)."""
    batch = x.shape[0]
    num_tc, vmem_cap = _tpu_generation_info()
    bp, tb = _choose_batch_tile(batch, num_tc)
    fp, wp, op, depth = dims["fp"], dims["wp"], dims["op"], dims["depth"]
    x_pad = _pad2(x, bp, fp).astype(jnp.bfloat16)
    xr_pad = _pad2(x_ref, bp, fp).astype(jnp.bfloat16)

    flops = (2 * (2 * bp) * (fp * wp + depth * wp * wp)
             + 2 * bp * (wp * wp + wp * op))
    bytes_acc = (2 * bp * fp * 2 + _weight_bytes(dims, with_head=True)
                 + bp * op * 4)
    vmem_limit = _vmem_budget_bytes(dims, tb, n_act_inputs=2, with_head=True,
                                    vmem_cap=vmem_cap)

    act_spec = pl.BlockSpec((tb, fp), lambda i: (i, 0), memory_space=_VMEM)
    out = pl.pallas_call(
        functools.partial(_siamese_fused_kernel, depth=depth),
        out_shape=jax.ShapeDtypeStruct((bp, op), jnp.float32),
        grid=(bp // tb,),
        in_specs=[act_spec, act_spec] + _weight_specs(dims) + [
            _const_spec((wp, wp)),
            _const_spec((1, wp)),
            _const_spec((wp, op)),
            _const_spec((1, op)),
        ],
        out_specs=pl.BlockSpec((tb, op), lambda i: (i, 0), memory_space=_VMEM),
        scratch_shapes=[pltpu.VMEM((2 * tb, fp), jnp.bfloat16)],
        compiler_params=_compiler_params(vmem_limit),
        cost_estimate=pl.CostEstimate(flops=int(flops), transcendentals=0,
                                      bytes_accessed=int(bytes_acc)),
    )(x_pad, xr_pad,
      packed["w_in"], packed["b_in"], packed["w_mlp"], packed["b_mlp"],
      packed["w_s1"], packed["b_s1"], packed["w_s2"], packed["b_s2"])
    return out[:batch, :dims["out_features"]]


# ---------------------------------------------------------------------------
# Deterministic parameter init (PyTorch-Linear-style uniform(-k, k))
# ---------------------------------------------------------------------------
def init_params(key, in_features, out_features, depth, width):
    keys = jax.random.split(key, 2 * depth + 6)

    def linear(kw, kb, fan_in, fan_out):
        bound = 1.0 / jnp.sqrt(jnp.float32(fan_in))
        # stored already transposed to (in, out)
        w = jax.random.uniform(kw, (fan_in, fan_out), jnp.float32, -bound, bound)
        b = jax.random.uniform(kb, (1, fan_out), jnp.float32, -bound, bound)
        return w, b

    w_in, b_in = linear(keys[0], keys[1], in_features, width)

    w_mlp, b_mlp = [], []
    for i in range(depth):
        w, b = linear(keys[2 + 2 * i], keys[3 + 2 * i], width, width)
        w_mlp.append(w)
        b_mlp.append(b)
    w_mlp = jnp.stack(w_mlp)            # (depth, width, width)
    b_mlp = jnp.stack(b_mlp)            # (depth, 1, width)

    w_s1, b_s1 = linear(keys[2 * depth + 2], keys[2 * depth + 3], width, width)
    w_s2, b_s2 = linear(keys[2 * depth + 4], keys[2 * depth + 5], width,
                        out_features)

    return {
        "w_in": w_in, "b_in": b_in,
        "w_mlp": w_mlp, "b_mlp": b_mlp,
        "w_s1": w_s1, "b_s1": b_s1,
        "w_s2": w_s2, "b_s2": b_s2,
    }


# ---------------------------------------------------------------------------
# Pure-JAX references (bf16 matmul operands, matching kernel numerics).
# NOTE: this validates the kernel against the same bf16-MXU quantization it
# uses internally, not against a pure-f32 PyTorch run.
# ---------------------------------------------------------------------------
def _dense_ref(x, w, b):
    return jnp.dot(x.astype(jnp.bfloat16), w.astype(jnp.bfloat16),
                   preferred_element_type=jnp.float32) + b


def rmlp_forward_ref(x, p):
    h1 = jnp.maximum(_dense_ref(x, p["w_in"], p["b_in"]), 0.0)
    h = h1
    for i in range(p["w_mlp"].shape[0]):
        h = jnp.maximum(_dense_ref(h, p["w_mlp"][i], p["b_mlp"][i]), 0.0)
    return h1 + h


def siamese_forward_ref(x, x_r, p):
    b = x.shape[0]
    z = rmlp_forward_ref(jnp.concatenate([x, x_r], 0), p)
    d = z[:b] - z[b:]
    h = jnp.maximum(_dense_ref(d, p["w_s1"], p["b_s1"]), 0.0)
    return _dense_ref(h, p["w_s2"], p["b_s2"])


# ---------------------------------------------------------------------------
if __name__ == "__main__":
    in_features, out_features, depth, width = 16, 4, 3, 32
    batch = 2

    key = jax.random.PRNGKey(0)
    k_params, k_x, k_xref = jax.random.split(key, 3)

    params = init_params(k_params, in_features, out_features, depth, width)
    packed, dims = pack_params(params)

    x = jax.random.normal(k_x, (batch, in_features), jnp.float32)
    x_r = jax.random.normal(k_xref, (batch, in_features), jnp.float32)

    # forward()
    y = rmlp_forward(x, packed, dims)
    y = jax.block_until_ready(y)
    y_ref = rmlp_forward_ref(x, params)
    assert y.shape == (batch, width)
    assert jnp.allclose(y, y_ref, atol=2e-3, rtol=2e-3)

    # siamese_forward() — single fused kernel
    s = siamese_forward(x, x_r, packed, dims)
    s = jax.block_until_ready(s)
    s_ref = siamese_forward_ref(x, x_r, params)
    assert s.shape == (batch, out_features)
    assert jnp.allclose(s, s_ref, atol=2e-3, rtol=2e-3)

    print("KERNEL_OK")
</pallas_src>

<mosaic_0001>
module attributes {stable_mosaic.version = 11 : i64} {
  func.func @_rmlp_kernel(%arg0: i32, %arg1: memref<16x128xbf16, #tpu.memory_space<vmem>>, %arg2: memref<128x128xbf16, #tpu.memory_space<vmem>>, %arg3: memref<1x128xf32, #tpu.memory_space<vmem>>, %arg4: memref<3x128x128xbf16, #tpu.memory_space<vmem>>, %arg5: memref<3x1x128xf32, #tpu.memory_space<vmem>>, %arg6: memref<16x128xf32, #tpu.memory_space<vmem>>) attributes {dimension_semantics = [#tpu.dimension_semantics<parallel>], iteration_bounds = array<i64: 1>, scalar_prefetch = 0 : i64, scratch_operands = 0 : i64, tpu.core_type = #tpu.core_type<tc>, window_params = [{transform_indices = @transform_0, window_bounds = array<i64: 16, 128>}, {pipeline_mode = #tpu.pipeline_mode<synchronous>, transform_indices = @transform_1, window_bounds = array<i64: 128, 128>}, {pipeline_mode = #tpu.pipeline_mode<synchronous>, transform_indices = @transform_2, window_bounds = array<i64: 1, 128>}, {pipeline_mode = #tpu.pipeline_mode<synchronous>, transform_indices = @transform_3, window_bounds = array<i64: 3, 128, 128>}, {pipeline_mode = #tpu.pipeline_mode<synchronous>, transform_indices = @transform_4, window_bounds = array<i64: 3, 1, 128>}, {transform_indices = @transform_5, window_bounds = array<i64: 16, 128>}]} {
    %c0 = arith.constant 0 : index
    %c0_0 = arith.constant 0 : index
    %0 = vector.load %arg1[%c0, %c0_0] : memref<16x128xbf16, #tpu.memory_space<vmem>>, vector<16x128xbf16>
    %c0_1 = arith.constant 0 : index
    %c0_2 = arith.constant 0 : index
    %1 = vector.load %arg2[%c0_1, %c0_2] : memref<128x128xbf16, #tpu.memory_space<vmem>>, vector<128x128xbf16>
    %c0_3 = arith.constant 0 : index
    %c0_4 = arith.constant 0 : index
    %2 = vector.load %arg3[%c0_3, %c0_4] : memref<1x128xf32, #tpu.memory_space<vmem>>, vector<1x128xf32>
    %cst = arith.constant dense<0.000000e+00> : vector<16x128xf32>
    %3 = tpu.matmul %0, %1, %cst {dimension_numbers = #tpu.dot_dimension_numbers<[1], [0], [0], [1], [0, 0, 1, 1], [], []>} : vector<16x128xbf16>, vector<128x128xbf16>, vector<16x128xf32> -> vector<16x128xf32>
    %4 = vector.broadcast %2 : vector<1x128xf32> to vector<16x128xf32>
    %5 = arith.addf %3, %4 : vector<16x128xf32>
    %cst_5 = arith.constant 0.000000e+00 : f32
    %6 = vector.broadcast %cst_5 : f32 to vector<16x128xf32>
    %7 = arith.maximumf %5, %6 : vector<16x128xf32>
    %c0_6 = arith.constant 0 : index
    %c0_7 = arith.constant 0 : index
    %c0_8 = arith.constant 0 : index
    %8 = vector.load %arg4[%c0_6, %c0_7, %c0_8] : memref<3x128x128xbf16, #tpu.memory_space<vmem>>, vector<1x128x128xbf16>
    %9 = vector.shape_cast %8 : vector<1x128x128xbf16> to vector<128x128xbf16>
    %c0_9 = arith.constant 0 : index
    %c0_10 = arith.constant 0 : index
    %c0_11 = arith.constant 0 : index
    %10 = vector.load %arg5[%c0_9, %c0_10, %c0_11] : memref<3x1x128xf32, #tpu.memory_space<vmem>>, vector<1x1x128xf32>
    %11 = vector.shape_cast %10 : vector<1x1x128xf32> to vector<1x128xf32>
    %12 = arith.truncf %7 : vector<16x128xf32> to vector<16x128xbf16>
    %cst_12 = arith.constant dense<0.000000e+00> : vector<16x128xf32>
    %13 = tpu.matmul %12, %9, %cst_12 {dimension_numbers = #tpu.dot_dimension_numbers<[1], [0], [0], [1], [0, 0, 1, 1], [], []>} : vector<16x128xbf16>, vector<128x128xbf16>, vector<16x128xf32> -> vector<16x128xf32>
    %14 = vector.broadcast %11 : vector<1x128xf32> to vector<16x128xf32>
    %15 = arith.addf %13, %14 : vector<16x128xf32>
    %cst_13 = arith.constant 0.000000e+00 : f32
    %16 = vector.broadcast %cst_13 : f32 to vector<16x128xf32>
    %17 = arith.maximumf %15, %16 : vector<16x128xf32>
    %c1 = arith.constant 1 : index
    %c0_14 = arith.constant 0 : index
    %c0_15 = arith.constant 0 : index
    %18 = vector.load %arg4[%c1, %c0_14, %c0_15] : memref<3x128x128xbf16, #tpu.memory_space<vmem>>, vector<1x128x128xbf16>
    %19 = vector.shape_cast %18 : vector<1x128x128xbf16> to vector<128x128xbf16>
    %c1_16 = arith.constant 1 : index
    %c0_17 = arith.constant 0 : index
    %c0_18 = arith.constant 0 : index
    %20 = vector.load %arg5[%c1_16, %c0_17, %c0_18] : memref<3x1x128xf32, #tpu.memory_space<vmem>>, vector<1x1x128xf32>
    %21 = vector.shape_cast %20 : vector<1x1x128xf32> to vector<1x128xf32>
    %22 = arith.truncf %17 : vector<16x128xf32> to vector<16x128xbf16>
    %cst_19 = arith.constant dense<0.000000e+00> : vector<16x128xf32>
    %23 = tpu.matmul %22, %19, %cst_19 {dimension_numbers = #tpu.dot_dimension_numbers<[1], [0], [0], [1], [0, 0, 1, 1], [], []>} : vector<16x128xbf16>, vector<128x128xbf16>, vector<16x128xf32> -> vector<16x128xf32>
    %24 = vector.broadcast %21 : vector<1x128xf32> to vector<16x128xf32>
    %25 = arith.addf %23, %24 : vector<16x128xf32>
    %cst_20 = arith.constant 0.000000e+00 : f32
    %26 = vector.broadcast %cst_20 : f32 to vector<16x128xf32>
    %27 = arith.maximumf %25, %26 : vector<16x128xf32>
    %c2 = arith.constant 2 : index
    %c0_21 = arith.constant 0 : index
    %c0_22 = arith.constant 0 : index
    %28 = vector.load %arg4[%c2, %c0_21, %c0_22] : memref<3x128x128xbf16, #tpu.memory_space<vmem>>, vector<1x128x128xbf16>
    %29 = vector.shape_cast %28 : vector<1x128x128xbf16> to vector<128x128xbf16>
    %c2_23 = arith.constant 2 : index
    %c0_24 = arith.constant 0 : index
    %c0_25 = arith.constant 0 : index
    %30 = vector.load %arg5[%c2_23, %c0_24, %c0_25] : memref<3x1x128xf32, #tpu.memory_space<vmem>>, vector<1x1x128xf32>
    %31 = vector.shape_cast %30 : vector<1x1x128xf32> to vector<1x128xf32>
    %32 = arith.truncf %27 : vector<16x128xf32> to vector<16x128xbf16>
    %cst_26 = arith.constant dense<0.000000e+00> : vector<16x128xf32>
    %33 = tpu.matmul %32, %29, %cst_26 {dimension_numbers = #tpu.dot_dimension_numbers<[1], [0], [0], [1], [0, 0, 1, 1], [], []>} : vector<16x128xbf16>, vector<128x128xbf16>, vector<16x128xf32> -> vector<16x128xf32>
    %34 = vector.broadcast %31 : vector<1x128xf32> to vector<16x128xf32>
    %35 = arith.addf %33, %34 : vector<16x128xf32>
    %cst_27 = arith.constant 0.000000e+00 : f32
    %36 = vector.broadcast %cst_27 : f32 to vector<16x128xf32>
    %37 = arith.maximumf %35, %36 : vector<16x128xf32>
    %38 = arith.addf %7, %37 : vector<16x128xf32>
    %c0_28 = arith.constant 0 : index
    %c0_29 = arith.constant 0 : index
    %39 = vector.load %arg6[%c0_28, %c0_29] : memref<16x128xf32, #tpu.memory_space<vmem>>, vector<16x128xf32>
    tpu.vector_store %arg6[%c0_28, %c0_29], %38 {strides = array<i32>} : memref<16x128xf32, #tpu.memory_space<vmem>>, vector<16x128xf32>,
    return
  }
  func.func @transform_0(%arg0: i32) -> (i32, i32) {
    %c0_i32 = arith.constant 0 : i32
    %c0_i32_0 = arith.constant 0 : i32
    return %arg0, %c0_i32 : i32, i32
  }
  func.func @transform_1(%arg0: i32) -> (i32, i32) {
    %c0_i32 = arith.constant 0 : i32
    %c0_i32_0 = arith.constant 0 : i32
    %c0_i32_1 = arith.constant 0 : i32
    return %c0_i32, %c0_i32_0 : i32, i32
  }
  func.func @transform_2(%arg0: i32) -> (i32, i32) {
    %c0_i32 = arith.constant 0 : i32
    %c0_i32_0 = arith.constant 0 : i32
    %c0_i32_1 = arith.constant 0 : i32
    return %c0_i32, %c0_i32_0 : i32, i32
  }
  func.func @transform_3(%arg0: i32) -> (i32, i32, i32) {
    %c0_i32 = arith.constant 0 : i32
    %c0_i32_0 = arith.constant 0 : i32
    %c0_i32_1 = arith.constant 0 : i32
    %c0_i32_2 = arith.constant 0 : i32
    return %c0_i32, %c0_i32_0, %c0_i32_1 : i32, i32, i32
  }
  func.func @transform_4(%arg0: i32) -> (i32, i32, i32) {
    %c0_i32 = arith.constant 0 : i32
    %c0_i32_0 = arith.constant 0 : i32
    %c0_i32_1 = arith.constant 0 : i32
    %c0_i32_2 = arith.constant 0 : i32
    return %c0_i32, %c0_i32_0, %c0_i32_1 : i32, i32, i32
  }
  func.func @transform_5(%arg0: i32) -> (i32, i32) {
    %c0_i32 = arith.constant 0 : i32
    %c0_i32_0 = arith.constant 0 : i32
    return %arg0, %c0_i32 : i32, i32
  }
}

</mosaic_0001>

<llo_original>
// kernel: tpu_custom_call.1
$region0: #{tpu_custom_call.1}
  #allocation0 [shape = 'u32[]', space=smem, size = 0x4, offset = 0x4, fixed_abs, tag = 'smem constant byte address 0x4 - core index']
  #allocation1 [shape = 'u32[144,128]{1,0:T(1,128)}', space=vmem, size = 0x12000, scoped, tag = 'internal scratch']
  %s0 = inlined_call_operand.hbm [shape: bf16[16,128], index: 0, kind: input, shape index: {}]
  %s1 = inlined_call_operand.hbm [shape: bf16[128,128], index: 1, kind: input, shape index: {}]
  %s2 = inlined_call_operand.vmem [shape: f32[1,128], index: 2, kind: input, shape index: {}]
  %s3 = inlined_call_operand.hbm [shape: bf16[3,128,128], index: 3, kind: input, shape index: {}]
  %s4 = inlined_call_operand.vmem [shape: f32[3,1,128], index: 4, kind: input, shape index: {}]
  %s5 = inlined_call_operand.hbm [shape: f32[16,128], index: 5, kind: output, shape index: {}]
  %s6 = sld [smem:[#allocation0]]
  $region42: #{tpu_custom_call.1} parent=0
    _
  %s8 = ssub.s32 1, %s6
  %s9 = scalar_select 0, %s8, %s6
  $region1: #{tpu_custom_call.1} parent=0
    #allocation2 [shape = 'u8[4096]{0}', space=vmem, size = 0x1000, scoped, tag = 'input window, operand 0, single buffered']
    #allocation3 [shape = 's32[1]{0}', space=sflag, size = 0x4, scoped, tag = 'scoped memory for tpu_custom_call.1']
    #allocation4 [shape = 's32[1]{0}', space=sflag, size = 0x4, scoped, tag = 'scoped memory for tpu_custom_call.1']
    #allocation5 [shape = 'u8[32768]{0}', space=vmem, size = 0x8000, scoped, tag = 'input window, operand 1, single buffered']
    #allocation6 [shape = 's32[1]{0}', space=sflag, size = 0x4, scoped, tag = 'scoped memory for tpu_custom_call.1']
    #allocation7 [shape = 'u8[98304]{0}', space=vmem, size = 0x18000, scoped, tag = 'input window, operand 3, single buffered']
    #allocation8 [shape = 'u8[8192]{0}', space=vmem, size = 0x2000, scoped, tag = 'output window, operand 0, single buffered']
    %10 = vsyncpa [#allocation3], 0
    %11 = vsyncpa [#allocation6], 0
    %12 = vsyncpa [#allocation4], 0
    // Predicated region
    $region2: #{tpu_custom_call.1} parent=1 // pred_check
      _
    $region3: #{tpu_custom_call.1} parent=1 // pred_check_branch
      %14 = sbr.rel (0) target = $region5
    $region4: #{tpu_custom_call.1} parent=1 // pred_region
      %s16 = ssub.s32 128, 128
      %17 = vsyncadd [#allocation3], %s16
      %s18 = sshll.u32 [#allocation2], 4
      %s19 = int_to_ptr.vmem [resolvable:$true] %s18
      %24 = dma.hbm_to_vmem [thread:$0]  %s0, 128, %s19, [#allocation3], 64, 64, 4
    $region5: #{tpu_custom_call.1} parent=1 // pred_fallthru
      _
    // Predicated region
    $region6: #{tpu_custom_call.1} parent=1 // pred_check
      _
    $region7: #{tpu_custom_call.1} parent=1 // pred_check_branch
      %26 = sbr.rel (0) target = $region9
    $region8: #{tpu_custom_call.1} parent=1 // pred_region
      %s28 = ssub.s32 1024, 1024
      %29 = vsyncadd [#allocation6], %s28
      %s30 = sshll.u32 [#allocation5], 4
      %s31 = int_to_ptr.vmem [resolvable:$true] %s30
      %36 = dma.hbm_to_vmem [thread:$0]  %s1, 1024, %s31, [#allocation6], 64, 64, 4
    $region9: #{tpu_custom_call.1} parent=1 // pred_fallthru
      _
    // Predicated region
    $region10: #{tpu_custom_call.1} parent=1 // pred_check
      _
    $region11: #{tpu_custom_call.1} parent=1 // pred_check_branch
      %38 = sbr.rel (0) target = $region13
    $region12: #{tpu_custom_call.1} parent=1 // pred_region
      _
    $region13: #{tpu_custom_call.1} parent=1 // pred_fallthru
      _
    // Predicated region
    $region14: #{tpu_custom_call.1} parent=1 // pred_check
      _
    $region15: #{tpu_custom_call.1} parent=1 // pred_check_branch
      %40 = sbr.rel (0) target = $region17
    $region16: #{tpu_custom_call.1} parent=1 // pred_region
      %s42 = ssub.s32 3072, 3072
      %43 = vsyncadd [#allocation6], %s42
      %s44 = sshll.u32 [#allocation7], 4
      %s45 = int_to_ptr.vmem [resolvable:$true] %s44
      %50 = dma.hbm_to_vmem [thread:$0]  %s3, 3072, %s45, [#allocation6], 64, 64, 4
    $region17: #{tpu_custom_call.1} parent=1 // pred_fallthru
      _
    // Predicated region
    $region18: #{tpu_custom_call.1} parent=1 // pred_check
      _
    $region19: #{tpu_custom_call.1} parent=1 // pred_check_branch
      %52 = sbr.rel (0) target = $region21
    $region20: #{tpu_custom_call.1} parent=1 // pred_region
      _
    $region21: #{tpu_custom_call.1} parent=1 // pred_fallthru
      _
    // Predicated region
    $region22: #{tpu_custom_call.1} parent=1 // pred_check
      _
    $region23: #{tpu_custom_call.1} parent=1 // pred_check_branch
      %54 = sbr.rel (0) target = $region25
    $region24: #{tpu_custom_call.1} parent=1 // pred_region
      %55 = dma.done [#allocation3], 128
    $region25: #{tpu_custom_call.1} parent=1 // pred_fallthru
      _
    // Predicated region
    $region26: #{tpu_custom_call.1} parent=1 // pred_check
      _
    $region27: #{tpu_custom_call.1} parent=1 // pred_check_branch
      %57 = sbr.rel (0) target = $region29
    $region28: #{tpu_custom_call.1} parent=1 // pred_region
      %58 = dma.done [#allocation6], 1024
    $region29: #{tpu_custom_call.1} parent=1 // pred_fallthru
      _
    // Predicated region
    $region30: #{tpu_custom_call.1} parent=1 // pred_check
      _
    $region31: #{tpu_custom_call.1} parent=1 // pred_check_branch
      %60 = sbr.rel (0) target = $region33
    $region32: #{tpu_custom_call.1} parent=1 // pred_region
      %61 = dma.done [#allocation6], 3072
    $region33: #{tpu_custom_call.1} parent=1 // pred_fallthru
      _
    %v63 = vld [vmem:[#allocation2] sm:$0xf]
    %v64 = vld [vmem:[#allocation2 + $0x4] sm:$0xf]
    %v65 = vld [vmem:[#allocation5] sm:$0xf]
    %v66 = vld [vmem:[#allocation5 + $0x4] sm:$0xf]
    %v67 = vld [vmem:[#allocation5 + $0x8] sm:$0xf]
    %v68 = vld [vmem:[#allocation5 + $0xc] sm:$0xf]
    %v69 = vld [vmem:[#allocation5 + $0x10] sm:$0xf]
    %v70 = vld [vmem:[#allocation5 + $0x14] sm:$0xf]
    %v71 = vld [vmem:[#allocation5 + $0x18] sm:$0xf]
    %v72 = vld [vmem:[#allocation5 + $0x1c] sm:$0xf]
    %v73 = vld [vmem:[#allocation5 + $0x20] sm:$0xf]
    %v74 = vld [vmem:[#allocation5 + $0x24] sm:$0xf]
    %v75 = vld [vmem:[#allocation5 + $0x28] sm:$0xf]
    %v76 = vld [vmem:[#allocation5 + $0x2c] sm:$0xf]
    %v77 = vld [vmem:[#allocation5 + $0x30] sm:$0xf]
    %v78 = vld [vmem:[#allocation5 + $0x34] sm:$0xf]
    %v79 = vld [vmem:[#allocation5 + $0x38] sm:$0xf]
    %v80 = vld [vmem:[#allocation5 + $0x3c] sm:$0xf]
    %v81 = vld [vmem:[%s2] sm:$0x1]
    %v83 = vlaneseq
    %v84 = vshrl.u32 %v83, 7
    %v85 = vsub.s32 0, %v84
    %v86 = vrot.slane %v81, %v85
    %v90 = vunpack.c.l.b16 %v63
    %v91 = vunpack.c.l.b16 %v64
    %v92 = vpack.c.b16 %v91, %v90
    %v110 = vunpack.c.l.b16 %v65
    %v111 = vunpack.c.l.b16 %v66
    %v112 = vunpack.c.l.b16 %v67
    %v113 = vunpack.c.l.b16 %v68
    %v114 = vunpack.c.l.b16 %v69
    %v115 = vunpack.c.l.b16 %v70
    %v116 = vunpack.c.l.b16 %v71
    %v117 = vunpack.c.l.b16 %v72
    %v118 = vunpack.c.l.b16 %v73
    %v119 = vunpack.c.l.b16 %v74
    %v120 = vunpack.c.l.b16 %v75
    %v121 = vunpack.c.l.b16 %v76
    %v122 = vunpack.c.l.b16 %v77
    %v123 = vunpack.c.l.b16 %v78
    %v124 = vunpack.c.l.b16 %v79
    %v125 = vunpack.c.l.b16 %v80
    %v126 = vpack.c.b16 %v111, %v110
    %v127 = vpack.c.b16 %v113, %v112
    %v128 = vpack.c.b16 %v115, %v114
    %v129 = vpack.c.b16 %v117, %v116
    %v130 = vpack.c.b16 %v119, %v118
    %v131 = vpack.c.b16 %v121, %v120
    %v132 = vpack.c.b16 %v123, %v122
    %v133 = vpack.c.b16 %v125, %v124
    %142 = vmatprep.subr.bf16.mxu0 0
    %143 = vmatpush1.bf16.msra.mxu0 %v126
    %144 = vmatprep.subr.bf16.mxu0 0
    %145 = vmatpush1.bf16.msra.mxu0 %v127
    %146 = vmatprep.subr.bf16.mxu0 0
    %147 = vmatpush1.bf16.msra.mxu0 %v128
    %148 = vmatprep.subr.bf16.mxu0 0
    %149 = vmatpush1.bf16.msra.mxu0 %v129
    %150 = vmatprep.subr.bf16.mxu0 0
    %151 = vmatpush1.bf16.msra.mxu0 %v130
    %152 = vmatprep.subr.bf16.mxu0 0
    %153 = vmatpush1.bf16.msra.mxu0 %v131
    %154 = vmatprep.subr.bf16.mxu0 0
    %155 = vmatpush1.bf16.msra.mxu0 %v132
    %156 = vmatprep.subr.bf16.mxu0 0
    %157 = vmatpush1.bf16.msra.mxu0 %v133
    %158 = vmatprep.subr.bf16.mxu0 0
    %159 = vmatpush1.bf16.msra.mxu0 0
    %160 = vmatprep.subr.bf16.mxu0 0
    %161 = vmatpush1.bf16.msra.mxu0 0
    %162 = vmatprep.subr.bf16.mxu0 0
    %163 = vmatpush1.bf16.msra.mxu0 0
    %164 = vmatprep.subr.bf16.mxu0 0
    %165 = vmatpush1.bf16.msra.mxu0 0
    %166 = vmatprep.subr.bf16.mxu0 0
    %167 = vmatpush1.bf16.msra.mxu0 0
    %168 = vmatprep.subr.bf16.mxu0 0
    %169 = vmatpush1.bf16.msra.mxu0 0
    %170 = vmatprep.subr.bf16.mxu0 0
    %171 = vmatpush1.bf16.msra.mxu0 0
    %172 = vmatprep.subr.bf16.mxu0 0
    %173 = vmatpush1.bf16.msra.mxu0 0
    %174 = vmatprep.mubr.bf16.mxu0 0
    %175 = vmatmul.mubr.bf16.gmra.mrb[0].mxu0 %v92
    %v176 = vpop.f32.mrb[0].mxu0
    %v177 = vadd.f32 %v86, %v176
    %v178 = vpop.f32.mrb[0].mxu0
    %v179 = vpop.f32.mrb[0].mxu0
    %v180 = vadd.f32 %v86, %v179
    %v181 = vpop.f32.mrb[0].mxu0
    %182 = vdwg.mxu0
    %v183 = vmax.f32 %v177, 0.0
    %v184 = vmax.f32 %v180, 0.0
    %v185 = vld [vmem:[#allocation7] sm:$0xf]
    %v186 = vld [vmem:[#allocation7 + $0x4] sm:$0xf]
    %v187 = vld [vmem:[#allocation7 + $0x8] sm:$0xf]
    %v188 = vld [vmem:[#allocation7 + $0xc] sm:$0xf]
    %v189 = vld [vmem:[#allocation7 + $0x10] sm:$0xf]
    %v190 = vld [vmem:[#allocation7 + $0x14] sm:$0xf]
    %v191 = vld [vmem:[#allocation7 + $0x18] sm:$0xf]
    %v192 = vld [vmem:[#allocation7 + $0x1c] sm:$0xf]
    %v193 = vld [vmem:[#allocation7 + $0x20] sm:$0xf]
    %v194 = vld [vmem:[#allocation7 + $0x24] sm:$0xf]
    %v195 = vld [vmem:[#allocation7 + $0x28] sm:$0xf]
    %v196 = vld [vmem:[#allocation7 + $0x2c] sm:$0xf]
    %v197 = vld [vmem:[#allocation7 + $0x30] sm:$0xf]
    %v198 = vld [vmem:[#allocation7 + $0x34] sm:$0xf]
    %v199 = vld [vmem:[#allocation7 + $0x38] sm:$0xf]
    %v200 = vld [vmem:[#allocation7 + $0x3c] sm:$0xf]
    %v201 = vld [vmem:[%s4] sm:$0x1]
    %v202 = vpack.c.bf16 %v184, %v183
    %v204 = vlaneseq
    %v205 = vshrl.u32 %v204, 7
    %v206 = vsub.s32 0, %v205
    %v207 = vrot.slane %v201, %v206
    %v225 = vunpack.c.l.b16 %v185
    %v226 = vunpack.c.l.b16 %v186
    %v227 = vunpack.c.l.b16 %v187
    %v228 = vunpack.c.l.b16 %v188
    %v229 = vunpack.c.l.b16 %v189
    %v230 = vunpack.c.l.b16 %v190
    %v231 = vunpack.c.l.b16 %v191
    %v232 = vunpack.c.l.b16 %v192
    %v233 = vunpack.c.l.b16 %v193
    %v234 = vunpack.c.l.b16 %v194
    %v235 = vunpack.c.l.b16 %v195
    %v236 = vunpack.c.l.b16 %v196
    %v237 = vunpack.c.l.b16 %v197
    %v238 = vunpack.c.l.b16 %v198
    %v239 = vunpack.c.l.b16 %v199
    %v240 = vunpack.c.l.b16 %v200
    %v241 = vpack.c.b16 %v226, %v225
    %v242 = vpack.c.b16 %v228, %v227
    %v243 = vpack.c.b16 %v230, %v229
    %v244 = vpack.c.b16 %v232, %v231
    %v245 = vpack.c.b16 %v234, %v233
    %v246 = vpack.c.b16 %v236, %v235
    %v247 = vpack.c.b16 %v238, %v237
    %v248 = vpack.c.b16 %v240, %v239
    %257 = vmatprep.subr.bf16.mxu0 0
    %258 = vmatpush1.bf16.msra.mxu0 %v241
    %259 = vmatprep.subr.bf16.mxu0 0
    %260 = vmatpush1.bf16.msra.mxu0 %v242
    %261 = vmatprep.subr.bf16.mxu0 0
    %262 = vmatpush1.bf16.msra.mxu0 %v243
    %263 = vmatprep.subr.bf16.mxu0 0
    %264 = vmatpush1.bf16.msra.mxu0 %v244
    %265 = vmatprep.subr.bf16.mxu0 0
    %266 = vmatpush1.bf16.msra.mxu0 %v245
    %267 = vmatprep.subr.bf16.mxu0 0
    %268 = vmatpush1.bf16.msra.mxu0 %v246
    %269 = vmatprep.subr.bf16.mxu0 0
    %270 = vmatpush1.bf16.msra.mxu0 %v247
    %271 = vmatprep.subr.bf16.mxu0 0
    %272 = vmatpush1.bf16.msra.mxu0 %v248
    %273 = vmatprep.subr.bf16.mxu0 0
    %274 = vmatpush1.bf16.msra.mxu0 0
    %275 = vmatprep.subr.bf16.mxu0 0
    %276 = vmatpush1.bf16.msra.mxu0 0
    %277 = vmatprep.subr.bf16.mxu0 0
    %278 = vmatpush1.bf16.msra.mxu0 0
    %279 = vmatprep.subr.bf16.mxu0 0
    %280 = vmatpush1.bf16.msra.mxu0 0
    %281 = vmatprep.subr.bf16.mxu0 0
    %282 = vmatpush1.bf16.msra.mxu0 0
    %283 = vmatprep.subr.bf16.mxu0 0
    %284 = vmatpush1.bf16.msra.mxu0 0
    %285 = vmatprep.subr.bf16.mxu0 0
    %286 = vmatpush1.bf16.msra.mxu0 0
    %287 = vmatprep.subr.bf16.mxu0 0
    %288 = vmatpush1.bf16.msra.mxu0 0
    %289 = vmatprep.mubr.bf16.mxu0 0
    %290 = vmatmul.mubr.bf16.gmra.mrb[0].mxu0 %v202
    %v291 = vpop.f32.mrb[0].mxu0
    %v292 = vadd.f32 %v207, %v291
    %v293 = vpop.f32.mrb[0].mxu0
    %v294 = vpop.f32.mrb[0].mxu0
    %v295 = vadd.f32 %v207, %v294
    %v296 = vpop.f32.mrb[0].mxu0
    %297 = vdwg.mxu0
    %v298 = vmax.f32 %v292, 0.0
    %v299 = vmax.f32 %v295, 0.0
    %s300 = scalar_lea.vmem [#allocation7], 64
    %v301 = vld [vmem:[%s300] sm:$0xf]
    %v302 = vld [vmem:[%s300 + $0x4] sm:$0xf]
    %v303 = vld [vmem:[%s300 + $0x8] sm:$0xf]
    %v304 = vld [vmem:[%s300 + $0xc] sm:$0xf]
    %v305 = vld [vmem:[%s300 + $0x10] sm:$0xf]
    %v306 = vld [vmem:[%s300 + $0x14] sm:$0xf]
    %v307 = vld [vmem:[%s300 + $0x18] sm:$0xf]
    %v308 = vld [vmem:[%s300 + $0x1c] sm:$0xf]
    %v309 = vld [vmem:[%s300 + $0x20] sm:$0xf]
    %v310 = vld [vmem:[%s300 + $0x24] sm:$0xf]
    %v311 = vld [vmem:[%s300 + $0x28] sm:$0xf]
    %v312 = vld [vmem:[%s300 + $0x2c] sm:$0xf]
    %v313 = vld [vmem:[%s300 + $0x30] sm:$0xf]
    %v314 = vld [vmem:[%s300 + $0x34] sm:$0xf]
    %v315 = vld [vmem:[%s300 + $0x38] sm:$0xf]
    %v316 = vld [vmem:[%s300 + $0x3c] sm:$0xf]
    %s317 = scalar_lea.vmem %s4, 1
    %v318 = vld [vmem:[%s317] sm:$0x1]
    %v319 = vpack.c.bf16 %v299, %v298
    %v321 = vlaneseq
    %v322 = vshrl.u32 %v321, 7
    %v323 = vsub.s32 0, %v322
    %v324 = vrot.slane %v318, %v323
    %v342 = vunpack.c.l.b16 %v301
    %v343 = vunpack.c.l.b16 %v302
    %v344 = vunpack.c.l.b16 %v303
    %v345 = vunpack.c.l.b16 %v304
    %v346 = vunpack.c.l.b16 %v305
    %v347 = vunpack.c.l.b16 %v306
    %v348 = vunpack.c.l.b16 %v307
    %v349 = vunpack.c.l.b16 %v308
    %v350 = vunpack.c.l.b16 %v309
    %v351 = vunpack.c.l.b16 %v310
    %v352 = vunpack.c.l.b16 %v311
    %v353 = vunpack.c.l.b16 %v312
    %v354 = vunpack.c.l.b16 %v313
    %v355 = vunpack.c.l.b16 %v314
    %v356 = vunpack.c.l.b16 %v315
    %v357 = vunpack.c.l.b16 %v316
    %v358 = vpack.c.b16 %v343, %v342
    %v359 = vpack.c.b16 %v345, %v344
    %v360 = vpack.c.b16 %v347, %v346
    %v361 = vpack.c.b16 %v349, %v348
    %v362 = vpack.c.b16 %v351, %v350
    %v363 = vpack.c.b16 %v353, %v352
    %v364 = vpack.c.b16 %v355, %v354
    %v365 = vpack.c.b16 %v357, %v356
    %374 = vmatprep.subr.bf16.mxu0 0
    %375 = vmatpush1.bf16.msra.mxu0 %v358
    %376 = vmatprep.subr.bf16.mxu0 0
    %377 = vmatpush1.bf16.msra.mxu0 %v359
    %378 = vmatprep.subr.bf16.mxu0 0
    %379 = vmatpush1.bf16.msra.mxu0 %v360
    %380 = vmatprep.subr.bf16.mxu0 0
    %381 = vmatpush1.bf16.msra.mxu0 %v361
    %382 = vmatprep.subr.bf16.mxu0 0
    %383 = vmatpush1.bf16.msra.mxu0 %v362
    %384 = vmatprep.subr.bf16.mxu0 0
    %385 = vmatpush1.bf16.msra.mxu0 %v363
    %386 = vmatprep.subr.bf16.mxu0 0
    %387 = vmatpush1.bf16.msra.mxu0 %v364
    %388 = vmatprep.subr.bf16.mxu0 0
    %389 = vmatpush1.bf16.msra.mxu0 %v365
    %390 = vmatprep.subr.bf16.mxu0 0
    %391 = vmatpush1.bf16.msra.mxu0 0
    %392 = vmatprep.subr.bf16.mxu0 0
    %393 = vmatpush1.bf16.msra.mxu0 0
    %394 = vmatprep.subr.bf16.mxu0 0
    %395 = vmatpush1.bf16.msra.mxu0 0
    %396 = vmatprep.subr.bf16.mxu0 0
    %397 = vmatpush1.bf16.msra.mxu0 0
    %398 = vmatprep.subr.bf16.mxu0 0
    %399 = vmatpush1.bf16.msra.mxu0 0
    %400 = vmatprep.subr.bf16.mxu0 0
    %401 = vmatpush1.bf16.msra.mxu0 0
    %402 = vmatprep.subr.bf16.mxu0 0
    %403 = vmatpush1.bf16.msra.mxu0 0
    %404 = vmatprep.subr.bf16.mxu0 0
    %405 = vmatpush1.bf16.msra.mxu0 0
    %406 = vmatprep.mubr.bf16.mxu0 0
    %407 = vmatmul.mubr.bf16.gmra.mrb[0].mxu0 %v319
    %v408 = vpop.f32.mrb[0].mxu0
    %v409 = vadd.f32 %v324, %v408
    %v410 = vpop.f32.mrb[0].mxu0
    %v411 = vpop.f32.mrb[0].mxu0
    %v412 = vadd.f32 %v324, %v411
    %v413 = vpop.f32.mrb[0].mxu0
    %414 = vdwg.mxu0
    %v415 = vmax.f32 %v409, 0.0
    %v416 = vmax.f32 %v412, 0.0
    %s417 = scalar_lea.vmem [#allocation7], 128
    %v418 = vld [vmem:[%s417] sm:$0xf]
    %v419 = vld [vmem:[%s417 + $0x4] sm:$0xf]
    %v420 = vld [vmem:[%s417 + $0x8] sm:$0xf]
    %v421 = vld [vmem:[%s417 + $0xc] sm:$0xf]
    %v422 = vld [vmem:[%s417 + $0x10] sm:$0xf]
    %v423 = vld [vmem:[%s417 + $0x14] sm:$0xf]
    %v424 = vld [vmem:[%s417 + $0x18] sm:$0xf]
    %v425 = vld [vmem:[%s417 + $0x1c] sm:$0xf]
    %v426 = vld [vmem:[%s417 + $0x20] sm:$0xf]
    %v427 = vld [vmem:[%s417 + $0x24] sm:$0xf]
    %v428 = vld [vmem:[%s417 + $0x28] sm:$0xf]
    %v429 = vld [vmem:[%s417 + $0x2c] sm:$0xf]
    %v430 = vld [vmem:[%s417 + $0x30] sm:$0xf]
    %v431 = vld [vmem:[%s417 + $0x34] sm:$0xf]
    %v432 = vld [vmem:[%s417 + $0x38] sm:$0xf]
    %v433 = vld [vmem:[%s417 + $0x3c] sm:$0xf]
    %s434 = scalar_lea.vmem %s4, 2
    %v435 = vld [vmem:[%s434] sm:$0x1]
    %v436 = vpack.c.bf16 %v416, %v415
    %v438 = vlaneseq
    %v439 = vshrl.u32 %v438, 7
    %v440 = vsub.s32 0, %v439
    %v441 = vrot.slane %v435, %v440
    %v459 = vunpack.c.l.b16 %v418
    %v460 = vunpack.c.l.b16 %v419
    %v461 = vunpack.c.l.b16 %v420
    %v462 = vunpack.c.l.b16 %v421
    %v463 = vunpack.c.l.b16 %v422
    %v464 = vunpack.c.l.b16 %v423
    %v465 = vunpack.c.l.b16 %v424
    %v466 = vunpack.c.l.b16 %v425
    %v467 = vunpack.c.l.b16 %v426
    %v468 = vunpack.c.l.b16 %v427
    %v469 = vunpack.c.l.b16 %v428
    %v470 = vunpack.c.l.b16 %v429
    %v471 = vunpack.c.l.b16 %v430
    %v472 = vunpack.c.l.b16 %v431
    %v473 = vunpack.c.l.b16 %v432
    %v474 = vunpack.c.l.b16 %v433
    %v475 = vpack.c.b16 %v460, %v459
    %v476 = vpack.c.b16 %v462, %v461
    %v477 = vpack.c.b16 %v464, %v463
    %v478 = vpack.c.b16 %v466, %v465
    %v479 = vpack.c.b16 %v468, %v467
    %v480 = vpack.c.b16 %v470, %v469
    %v481 = vpack.c.b16 %v472, %v471
    %v482 = vpack.c.b16 %v474, %v473
    %491 = vmatprep.subr.bf16.mxu0 0
    %492 = vmatpush1.bf16.msra.mxu0 %v475
    %493 = vmatprep.subr.bf16.mxu0 0
    %494 = vmatpush1.bf16.msra.mxu0 %v476
    %495 = vmatprep.subr.bf16.mxu0 0
    %496 = vmatpush1.bf16.msra.mxu0 %v477
    %497 = vmatprep.subr.bf16.mxu0 0
    %498 = vmatpush1.bf16.msra.mxu0 %v478
    %499 = vmatprep.subr.bf16.mxu0 0
    %500 = vmatpush1.bf16.msra.mxu0 %v479
    %501 = vmatprep.subr.bf16.mxu0 0
    %502 = vmatpush1.bf16.msra.mxu0 %v480
    %503 = vmatprep.subr.bf16.mxu0 0
    %504 = vmatpush1.bf16.msra.mxu0 %v481
    %505 = vmatprep.subr.bf16.mxu0 0
    %506 = vmatpush1.bf16.msra.mxu0 %v482
    %507 = vmatprep.subr.bf16.mxu0 0
    %508 = vmatpush1.bf16.msra.mxu0 0
    %509 = vmatprep.subr.bf16.mxu0 0
    %510 = vmatpush1.bf16.msra.mxu0 0
    %511 = vmatprep.subr.bf16.mxu0 0
    %512 = vmatpush1.bf16.msra.mxu0 0
    %513 = vmatprep.subr.bf16.mxu0 0
    %514 = vmatpush1.bf16.msra.mxu0 0
    %515 = vmatprep.subr.bf16.mxu0 0
    %516 = vmatpush1.bf16.msra.mxu0 0
    %517 = vmatprep.subr.bf16.mxu0 0
    %518 = vmatpush1.bf16.msra.mxu0 0
    %519 = vmatprep.subr.bf16.mxu0 0
    %520 = vmatpush1.bf16.msra.mxu0 0
    %521 = vmatprep.subr.bf16.mxu0 0
    %522 = vmatpush1.bf16.msra.mxu0 0
    %523 = vmatprep.mubr.bf16.mxu0 0
    %524 = vmatmul.mubr.bf16.gmra.mrb[0].mxu0 %v436
    %v525 = vpop.f32.mrb[0].mxu0
    %v526 = vadd.f32 %v441, %v525
    %v527 = vpop.f32.mrb[0].mxu0
    %v528 = vpop.f32.mrb[0].mxu0
    %v529 = vadd.f32 %v441, %v528
    %v530 = vpop.f32.mrb[0].mxu0
    %531 = vdwg.mxu0
    %v532 = vmax.f32 %v526, 0.0
    %v533 = vmax.f32 %v529, 0.0
    %v534 = vadd.f32 %v183, %v532
    %v535 = vadd.f32 %v184, %v533
    %536 = vst [vmem:[#allocation8] sm:$0xff] %v534
    %537 = vst [vmem:[#allocation8 + $0x8] sm:$0xff] %v535
    // Predicated region
    $region34: #{tpu_custom_call.1} parent=1 // pred_check
      _
    $region35: #{tpu_custom_call.1} parent=1 // pred_check_branch
      %539 = sbr.rel (0) target = $region37
    $region36: #{tpu_custom_call.1} parent=1 // pred_region
      %s541 = ssub.s32 256, 256
      %542 = vsyncadd [#allocation4], %s541
      %s543 = sshll.u32 [#allocation8], 4
      %s544 = int_to_ptr.vmem [resolvable:$true] %s543
      %549 = dma.vmem_to_hbm [thread:$0]  %s544, 256, %s5, [#allocation4], 128, 128, 8
    $region37: #{tpu_custom_call.1} parent=1 // pred_fallthru
      _
    // Predicated region
    $region38: #{tpu_custom_call.1} parent=1 // pred_check
      _
    $region39: #{tpu_custom_call.1} parent=1 // pred_check_branch
      %551 = sbr.rel (0) target = $region41
    $region40: #{tpu_custom_call.1} parent=1 // pred_region
      %552 = dma.done [#allocation4], 256
    $region41: #{tpu_custom_call.1} parent=1 // pred_fallthru
      _
    %553 = vsyncpa [#allocation3], 1
    %554 = vsyncpa [#allocation6], 1
    %555 = vsyncpa [#allocation4], 1

</llo_original>
